<compile_context>
chip_gen: v7x
topology: tpu7x:2x2x1
jax: 0.10.0
libtpu: 0.0.40
codegen_flags: <defaults>
</compile_context>

<pallas_src>
import jax
import jax.numpy as jnp
from jax import lax
from jax.experimental import pallas as pl
from jax.experimental.pallas import tpu as pltpu


def _round_up(x: int, m: int) -> int:
    return ((x + m - 1) // m) * m


def _vmem_capacity_bytes() -> int:
    try:
        cap = getattr(pltpu.get_tpu_info(), "vmem_capacity_bytes", None)
        if cap:
            return int(cap)
    except Exception:
        pass
    return 128 * 1024 * 1024


def _make_kernel(*, tile_n: int, tile_d: int, d_row: int, num_k: int,
                 inv_denom: float):
    nblk = tile_d // 128                    # 128-lane blocks per full k step
    d_last = d_row - (num_k - 1) * tile_d   # valid lanes in the final k step
    nfull_last = d_last // 128              # fully-valid blocks in final step
    rem = d_last % 128                      # ragged tail lanes (0 => none)

    def sumsq_cols(x_ref, acc, nblocks):
        """acc += x[:, :nblocks*128]**2, one 128-lane column at a time (VPU)."""
        if nblocks == 0:
            return acc
        if nblocks <= 4:                    # tiny: static unroll is fine
            for j in range(nblocks):
                blk = x_ref[:, j * 128:(j + 1) * 128].astype(jnp.float32)
                acc = acc + blk * blk
            return acc

        def body(j, a):
            off = pl.multiple_of(j * 128, 128)
            blk = x_ref[:, pl.ds(off, 128)].astype(jnp.float32)
            return a + blk * blk
        # fori_loop(+unroll) bounds live ranges: acc + a few blocks in flight
        # instead of a fully-unrolled Python loop that risks vreg spills.
        return lax.fori_loop(0, nblocks, body, acc, unroll=4)

    def tail_sumsq(x_ref, acc):
        """Masked square-accumulate of the one block that straddles d_row."""
        off = nfull_last * 128              # compile-time constant
        blk = x_ref[:, off:off + 128].astype(jnp.float32)
        lane = lax.broadcasted_iota(jnp.int32, (tile_n, 128), 1)
        blk = jnp.where(lane < rem, blk, 0.0)   # zero DMA-pad / OOB lanes
        return acc + blk * blk

    def finalize(acc, o_ref):
        # Single cross-lane reduce + scale, once per row tile.
        o_ref[...] = (jnp.sum(acc, axis=1, keepdims=True)
                      * jnp.float32(inv_denom)).astype(o_ref.dtype)

    if num_k == 1:
        # Single reduction step: no scratch round-trip, reduce straight to o_ref.
        def kernel(x_ref, o_ref):
            acc = sumsq_cols(x_ref, jnp.zeros((tile_n, 128), jnp.float32),
                             nfull_last)
            if rem:
                acc = tail_sumsq(x_ref, acc)
            finalize(acc, o_ref)
        return kernel

    def kernel(x_ref, o_ref, acc_ref):
        k = pl.program_id(1)

        @pl.when(k == 0)
        def _():
            acc_ref[...] = jnp.zeros_like(acc_ref)

        # Hot path: every non-final k step is fully in range -> no masking.
        @pl.when(k < num_k - 1)
        def _():
            acc_ref[...] = sumsq_cols(x_ref, acc_ref[...], nblk)

        # Final step: statically-known split into full blocks / one masked
        # block / skipped blocks, then one cross-lane reduce + scale.
        @pl.when(k == num_k - 1)
        def _():
            acc = sumsq_cols(x_ref, acc_ref[...], nfull_last)
            if rem:
                acc = tail_sumsq(x_ref, acc)
            finalize(acc, o_ref)

    return kernel


def per_loss(x: jax.Array, *, target_tile_n: int = 128,
             target_tile_d: int | None = None,
             target_tile_bytes: int = 8 << 20) -> jax.Array:
    """Pallas TPU implementation of Per_LOSS.forward."""
    n, c, h, w = x.shape
    d = c * h * w
    inv_denom = 1.0 / float(d)

    # Fold small batches into the sublane axis so vregs are sublane-dense.
    r = 1
    if n % 8 != 0:
        for cand in (8, 4, 2):
            if d % cand == 0 and (n * cand) % 8 == 0:
                r = cand
                break
    rows, d_row = n * r, d // r
    xf = x.reshape(rows, d_row)

    itemsize = jnp.dtype(x.dtype).itemsize
    vmem_cap = _vmem_capacity_bytes()

    # ---- row tile ----------------------------------------------------------
    tn_target = _round_up(max(target_tile_n, 8), 8)
    if rows % 8 == 0:
        tile_n = min(tn_target, rows)
        if rows >= 16:
            # Keep >= 2 row tiles so the "parallel" axis can shard across both
            # v7x TensorCores (single-TC v5e/v6e: harmless).
            tile_n = min(tile_n, max(8, _round_up(pl.cdiv(rows, 2), 8)))
    elif rows <= tn_target:
        tile_n = rows            # full-dim block (ragged sublane count)
    else:
        # Partial last row tile: out-of-range sublanes hold garbage that gets
        # squared, but each row reduces independently and padded rows are
        # clipped on writeback, so valid rows are unaffected.
        tile_n = tn_target

    # ---- reduction tile (always a lane multiple; ragged tail masked) -------
    d_pad = _round_up(d_row, 128)
    if target_tile_d is not None:
        td_target = _round_up(max(int(target_tile_d), 128), 128)
    else:
        budget = min(int(target_tile_bytes), vmem_cap // 6)
        td_target = max(128, (budget // max(tile_n * itemsize, 1)) // 128 * 128)
    tile_d = min(td_target, d_pad)

    num_i = pl.cdiv(rows, tile_n)
    num_k = pl.cdiv(d_row, tile_d)

    kernel = _make_kernel(tile_n=tile_n, tile_d=tile_d, d_row=d_row,
                          num_k=num_k, inv_denom=inv_denom)

    # ---- VMEM budget (generation-aware cap) --------------------------------
    vmem_bytes = 2 * tile_n * tile_d * itemsize + 2 * tile_n * 4
    if num_k > 1:
        vmem_bytes += tile_n * 128 * 4
    vmem_limit = max(vmem_bytes + (8 << 20), 32 << 20)
    vmem_limit = min(vmem_limit, vmem_cap * 3 // 4)   # headroom on v7x (64 MiB)
    vmem_limit = max(vmem_limit, vmem_bytes + (2 << 20))

    if num_k == 1:
        grid = (num_i,)
        in_specs = [pl.BlockSpec((tile_n, tile_d), lambda i: (i, 0))]
        out_specs = pl.BlockSpec((tile_n, 1), lambda i: (i, 0))
        scratch_shapes = []
        dim_sem = ("parallel",)
    else:
        grid = (num_i, num_k)                          # reduction innermost
        in_specs = [pl.BlockSpec((tile_n, tile_d), lambda i, k: (i, k))]
        out_specs = pl.BlockSpec((tile_n, 1), lambda i, k: (i, 0))
        scratch_shapes = [pltpu.VMEM((tile_n, 128), jnp.float32)]
        dim_sem = ("parallel", "arbitrary")

    out = pl.pallas_call(
        kernel,
        out_shape=jax.ShapeDtypeStruct((rows, 1), jnp.float32),
        grid_spec=pltpu.PrefetchScalarGridSpec(
            num_scalar_prefetch=0,
            grid=grid,
            in_specs=in_specs,
            out_specs=out_specs,
            scratch_shapes=scratch_shapes,
        ),
        compiler_params=pltpu.CompilerParams(
            dimension_semantics=dim_sem,
            vmem_limit_bytes=int(vmem_limit),
        ),
    )(xf)

    per_row = out[:, 0]
    if r > 1:
        per_row = per_row.reshape(n, r).sum(axis=1)
    return per_row


def _ref_loss(x):
    _, c, h, w = x.shape
    return jnp.sum(jnp.square(x), axis=(1, 2, 3)) / (c * h * w)


if __name__ == "__main__":
    # Primary spec case: batch=2, channels=4, spatial=16 (folds to rows=16).
    x = jax.random.normal(jax.random.PRNGKey(0), (2, 4, 16, 16), jnp.float32)
    loss = per_loss(x)
    jax.block_until_ready(loss)
    assert loss.shape == (2,)
    assert jnp.allclose(loss, _ref_loss(x), rtol=1e-5, atol=1e-5), loss

    # Ragged reduction length, single k step (masked tail block only).
    x2 = jax.random.normal(jax.random.PRNGKey(1), (3, 3, 10, 10), jnp.float32)
    loss2 = per_loss(x2)
    jax.block_until_ready(loss2)
    assert jnp.allclose(loss2, _ref_loss(x2), rtol=1e-4, atol=1e-5), loss2

    # Multi-step reduction with an in-kernel masked tail (no HBM pad copy).
    x3 = jax.random.normal(jax.random.PRNGKey(2), (2, 3, 41, 41), jnp.float32)
    loss3 = per_loss(x3, target_tile_d=2048)
    jax.block_until_ready(loss3)
    assert jnp.allclose(loss3, _ref_loss(x3), rtol=1e-4, atol=1e-5), loss3

    # Partial last row tile (rows % tile_n != 0): padded rows squared but
    # clipped on writeback; valid rows unaffected.
    x4 = jax.random.normal(jax.random.PRNGKey(3), (5, 4, 16, 16), jnp.float32)
    loss4 = per_loss(x4, target_tile_n=24)
    jax.block_until_ready(loss4)
    assert jnp.allclose(loss4, _ref_loss(x4), rtol=1e-5, atol=1e-5), loss4

    print("KERNEL_OK")
</pallas_src>

<mosaic_0001>
module attributes {stable_mosaic.version = 11 : i64} {
  func.func @kernel(%arg0: i32, %arg1: memref<8x128xf32, #tpu.memory_space<vmem>>, %arg2: memref<8x1xf32, #tpu.memory_space<vmem>>) attributes {dimension_semantics = [#tpu.dimension_semantics<parallel>], iteration_bounds = array<i64: 2>, scalar_prefetch = 0 : i64, scratch_operands = 0 : i64, tpu.core_type = #tpu.core_type<tc>, window_params = [{transform_indices = @transform_0, window_bounds = array<i64: 8, 128>}, {transform_indices = @transform_1, window_bounds = array<i64: 8, 1>}]} {
    %cst = arith.constant 0.000000e+00 : f32
    %0 = vector.broadcast %cst : f32 to vector<8x128xf32>
    %c0 = arith.constant 0 : index
    %c0_0 = arith.constant 0 : index
    %1 = vector.load %arg1[%c0, %c0_0] : memref<8x128xf32, #tpu.memory_space<vmem>>, vector<8x128xf32>
    %2 = arith.mulf %1, %1 : vector<8x128xf32>
    %3 = arith.addf %0, %2 : vector<8x128xf32>
    %cst_1 = arith.constant dense<0.000000e+00> : vector<8xf32>
    %4 = vector.multi_reduction <add>, %3, %cst_1 [1] : vector<8x128xf32> to vector<8xf32>
    %5 = vector.shape_cast %4 : vector<8xf32> to vector<8x1xf32>
    %cst_2 = arith.constant 9.765625E-4 : f32
    %6 = vector.broadcast %cst_2 : f32 to vector<8x1xf32>
    %7 = arith.mulf %5, %6 : vector<8x1xf32>
    %c0_3 = arith.constant 0 : index
    %c0_4 = arith.constant 0 : index
    %8 = vector.load %arg2[%c0_3, %c0_4] : memref<8x1xf32, #tpu.memory_space<vmem>>, vector<8x1xf32>
    tpu.vector_store %arg2[%c0_3, %c0_4], %7 {strides = array<i32>} : memref<8x1xf32, #tpu.memory_space<vmem>>, vector<8x1xf32>,
    return
  }
  func.func @transform_0(%arg0: i32) -> (i32, i32) {
    %c0_i32 = arith.constant 0 : i32
    %c0_i32_0 = arith.constant 0 : i32
    return %arg0, %c0_i32 : i32, i32
  }
  func.func @transform_1(%arg0: i32) -> (i32, i32) {
    %c0_i32 = arith.constant 0 : i32
    %c0_i32_0 = arith.constant 0 : i32
    return %arg0, %c0_i32 : i32, i32
  }
}

</mosaic_0001>

<llo_original>
// kernel: tpu_custom_call.1
$region0: #{tpu_custom_call.1}
  #allocation0 [shape = 'u32[]', space=smem, size = 0x4, offset = 0x4, fixed_abs, tag = 'smem constant byte address 0x4 - core index']
  #allocation1 [shape = 'u32[144,128]{1,0:T(1,128)}', space=vmem, size = 0x12000, scoped, tag = 'internal scratch']
  %s0 = inlined_call_operand.hbm [shape: f32[16,128], index: 0, kind: input, shape index: {}]
  %s1 = inlined_call_operand.vmem [shape: f32[16,1], index: 1, kind: output, shape index: {}]
  %s2 = sld [smem:[#allocation0]]
  $region41: #{tpu_custom_call.1} parent=0
    _
  %s4 = ssub.s32 1, %s2
  %s5 = scalar_select 0, %s4, %s2
  $region1: #{tpu_custom_call.1} parent=0
    #allocation2 [shape = 'u8[8192]{0}', space=vmem, size = 0x2000, scoped, tag = 'input window, operand 0']
    #allocation3 [shape = 's32[2]{0}', space=sflag, size = 0x8, scoped, tag = 'scoped memory for tpu_custom_call.1']
    %6 = vsyncpa [#allocation3], 0
    %s7 = scalar_lea.sflag [#allocation3], 1
    %8 = vsyncpa %s7, 0
    loop: start=0, step=1, limit=4
    $region2: #{tpu_custom_call.1} parent=1 // loop_pre_header
      _
    $region3: #{tpu_custom_call.1} parent=1 // loop_header
      %s10 = sphi 0, %s14
      %p11 = scmp.ge.s32.totalorder %s10, 4
      %s20 = sphi 0, %s22
      %s23 = sphi 0, %s20
      %s24 = sphi 0, %s23
      %s40 = sphi 0, %s24
      %s46 = sphi 0, %s48
      %s49 = sphi 0, %s46
      %s50 = sphi 0, %s49
      %s66 = sphi 0, %s50
    $region4: #{tpu_custom_call.1} parent=1 // loop_header_branch
      %13 = sbr.rel (%p11) target = $region8
    $region5: #{tpu_custom_call.1} parent=1 // loop_body
      %s15 = ssub.s32 %s10, 1
      %s16 = ssub.s32 %s10, 2
      %s17 = sadd.s32 %s10, 1
      %s18 = ssub.s32 %s10, %s17
      %p19 = scmp.eq.s32.totalorder %s18, 0
      %s21 = sadd.s32 %s20, 1
      %s22 = scalar_select %p19, %s20, %s21
      %p25 = pneg %p19
      %p26 = scmp.eq.s32.totalorder %s10, 1
      %p27 = por %p25, %p26
      %p28 = scmp.ne.s32.totalorder %s20, %s23
      %p29 = scmp.eq.s32.totalorder %s10, 0
      %p30 = por %p28, %p29
      %p31 = scmp.ne.s32.totalorder %s20, %s23
      %p32 = scmp.eq.s32.totalorder %s15, 1
      %p33 = por %p31, %p32
      %p34 = scmp.ne.s32.totalorder %s23, %s24
      %p35 = scmp.eq.s32.totalorder %s15, 0
      %p36 = por %p34, %p35
      %p37 = scmp.ne.s32.totalorder %s23, %s24
      %p38 = scmp.eq.s32.totalorder %s16, 1
      %p39 = por %p37, %p38
      %p41 = scmp.ne.s32.totalorder %s24, %s40
      %p42 = scmp.eq.s32.totalorder %s16, 0
      %p43 = por %p41, %p42
      %s44 = ssub.s32 %s10, %s17
      %p45 = scmp.eq.s32.totalorder %s44, 0
      %s47 = sadd.s32 %s46, 1
      %s48 = scalar_select %p45, %s46, %s47
      %p51 = pneg %p45
      %p52 = scmp.eq.s32.totalorder %s10, 1
      %p53 = por %p51, %p52
      %p54 = scmp.ne.s32.totalorder %s46, %s49
      %p55 = scmp.eq.s32.totalorder %s10, 0
      %p56 = por %p54, %p55
      %p57 = scmp.ne.s32.totalorder %s46, %s49
      %p58 = scmp.eq.s32.totalorder %s15, 1
      %p59 = por %p57, %p58
      %p60 = scmp.ne.s32.totalorder %s49, %s50
      %p61 = scmp.eq.s32.totalorder %s15, 0
      %p62 = por %p60, %p61
      %p63 = scmp.ne.s32.totalorder %s49, %s50
      %p64 = scmp.eq.s32.totalorder %s16, 1
      %p65 = por %p63, %p64
      %p67 = scmp.ne.s32.totalorder %s50, %s66
      %p68 = scmp.eq.s32.totalorder %s16, 0
      %p69 = por %p67, %p68
      %p70 = scmp.le.s32.totalorder 1, %s10
      %p71 = scmp.lt.s32.totalorder %s10, 3
      %p72 = pnand %p70, %p71
      %p73 = pneg %p72
      // Predicated region
      $region9: #{tpu_custom_call.1} parent=5 // pred_check
        _
      $region10: #{tpu_custom_call.1} parent=5 // pred_check_branch
        %75 = sbr.rel (%p72) target = $region12
      $region11: #{tpu_custom_call.1} parent=5 // pred_region
        %s76 = ssub.s32 %s10, 1
      $region12: #{tpu_custom_call.1} parent=5 // pred_fallthru
        _
      %p77 = scmp.lt.s32.totalorder %s10, 2
      // Predicated region
      $region13: #{tpu_custom_call.1} parent=5 // pred_check
        %p78 = pneg %p77
      $region14: #{tpu_custom_call.1} parent=5 // pred_check_branch
        %80 = sbr.rel (%p78) target = $region16
      $region15: #{tpu_custom_call.1} parent=5 // pred_region
        // Predicated region
        $region17: #{tpu_custom_call.1} parent=15 // pred_check
          %p81 = pneg %p30
        $region18: #{tpu_custom_call.1} parent=15 // pred_check_branch
          %83 = sbr.rel (%p81) target = $region20
        $region19: #{tpu_custom_call.1} parent=15 // pred_region
          %s84 = sand.u32 %s20, 1
          %s85 = scalar_lea.sflag [#allocation3], %s84
          %s86 = sand.u32 %s20, 1
          %s87 = smul.addr %s86, 8
          %s88 = scalar_lea.vmem [#allocation2], %s87
          %s90 = ssub.s32 128, 128
          %91 = vsyncadd %s85, %s90
          %s92 = smul.addr %s10, 128
          %s93 = scalar_lea.hbm %s0, %s92
          %s95 = sshll.u32 %s88, 4
          %s96 = int_to_ptr.vmem [resolvable:$true] %s95
          %98 = dma.hbm_to_vmem [thread:$0]  %s93, 128, %s96, %s85
        $region20: #{tpu_custom_call.1} parent=15 // pred_fallthru
          _
      $region16: #{tpu_custom_call.1} parent=5 // pred_fallthru
        _
      %p99 = scmp.le.s32.totalorder 1, %s10
      %p100 = scmp.lt.s32.totalorder %s10, 3
      %p101 = pnand %p99, %p100
      %p102 = pneg %p101
      // Predicated region
      $region21: #{tpu_custom_call.1} parent=5 // pred_check
        _
      $region22: #{tpu_custom_call.1} parent=5 // pred_check_branch
        %104 = sbr.rel (%p101) target = $region24
      $region23: #{tpu_custom_call.1} parent=5 // pred_region
        %s105 = ssub.s32 %s10, 1
        %s106 = sand.u32 %s23, 1
        %s107 = scalar_lea.sflag [#allocation3], %s106
        %s108 = sand.u32 %s23, 1
        %s109 = smul.addr %s108, 8
        %s110 = scalar_lea.vmem [#allocation2], %s109
        // Predicated region
        $region25: #{tpu_custom_call.1} parent=23 // pred_check
          %p111 = pneg %p36
        $region26: #{tpu_custom_call.1} parent=23 // pred_check_branch
          %113 = sbr.rel (%p111) target = $region28
        $region27: #{tpu_custom_call.1} parent=23 // pred_region
          %114 = dma.done %s107, 128
        $region28: #{tpu_custom_call.1} parent=23 // pred_fallthru
          _
        %s115 = sand.u32 %s23, 1
        %s116 = scalar_lea.sflag [#allocation3], %s115
        %s117 = sand.u32 %s23, 1
        %s118 = smul.addr %s117, 8
        %s119 = scalar_lea.vmem [#allocation2], %s118
        %p120 = pneg %p36
        %p121 = pneg %p33
        %p122 = pneg %p62
        %p123 = pneg %p59
        %p124 = scmp.lt.s32.totalorder %s15, 1
        %s125 = scalar_select %p124, %s15, 1
        %s126 = smul.addr %s125, 8
        %s127 = scalar_lea.vmem %s1, %s126
        %p128 = scmp.lt.s32.totalorder %s15, 1
        %s129 = scalar_select %p128, %s15, 1
        %s130 = smul.addr %s129, 8
        %s131 = scalar_lea.vmem %s1, %s130
        %v132 = vld [vmem:[%s110] sm:$0xff]
        %v133 = vmul.f32 %v132, %v132
        %v134 = vadd.f32 %v133, 0.0
        %135 = vadd.xlane.f32.xlu0 %v134
        %v136 = vpop.xlane.xlu0 %135
        %v137 = vmul.f32 %v136, 0.0009765625
        %vm138 = vcmask 7168
        %139 = vst.msk [vmem:[%s131] sm:$0xff] %vm138, %v137
        %p140 = scmp.lt.s32.totalorder %s15, 1
        %s141 = scalar_select %p140, %s15, 1
        %s142 = smul.addr %s141, 8
        %s143 = scalar_lea.vmem %s1, %s142
        // Predicated region
        $region29: #{tpu_custom_call.1} parent=23 // pred_check
          %p144 = pneg %p59
        $region30: #{tpu_custom_call.1} parent=23 // pred_check_branch
          %146 = sbr.rel (%p144) target = $region32
        $region31: #{tpu_custom_call.1} parent=23 // pred_region
          _
        $region32: #{tpu_custom_call.1} parent=23 // pred_fallthru
          _
      $region24: #{tpu_custom_call.1} parent=5 // pred_fallthru
        _
      %p147 = scmp.le.s32.totalorder 2, %s10
      // Predicated region
      $region33: #{tpu_custom_call.1} parent=5 // pred_check
        %p148 = pneg %p147
      $region34: #{tpu_custom_call.1} parent=5 // pred_check_branch
        %150 = sbr.rel (%p148) target = $region36
      $region35: #{tpu_custom_call.1} parent=5 // pred_region
        %s151 = ssub.s32 %s10, 2
        // Predicated region
        $region37: #{tpu_custom_call.1} parent=35 // pred_check
          %p152 = pneg %p65
        $region38: #{tpu_custom_call.1} parent=35 // pred_check_branch
          %154 = sbr.rel (%p152) target = $region40
        $region39: #{tpu_custom_call.1} parent=35 // pred_region
          %p155 = scmp.lt.s32.totalorder %s16, 1
          %s156 = scalar_select %p155, %s16, 1
          %s157 = smul.addr %s156, 8
          %s158 = scalar_lea.vmem %s1, %s157
        $region40: #{tpu_custom_call.1} parent=35 // pred_fallthru
          _
      $region36: #{tpu_custom_call.1} parent=5 // pred_fallthru
        _
    $region6: #{tpu_custom_call.1} parent=1 // loop_footer
      %s14 = sadd.s32 1, %s10
    $region7: #{tpu_custom_call.1} parent=1 // loop_footer_branch
      %9 = sbr.rel target = $region3
    $region8: #{tpu_custom_call.1} parent=1 // loop_exit
      _
    %159 = vsyncpa [#allocation3], 1
    %s160 = scalar_lea.sflag [#allocation3], 1
    %161 = vsyncpa %s160, 1

</llo_original>
